<compile_context>
chip_gen: v5e
topology: v5e:2x2
jax: 0.10.0
libtpu: 0.0.40
codegen_flags: <defaults>
</compile_context>

<pallas_src>
import jax
import jax.numpy as jnp
from jax.experimental import pallas as pl
from jax.experimental.pallas import tpu as pltpu

INPUT_DIM = 35
OUTPUT_DIM = 2

# Folded (post-GEMM-widening) rows per grid step.  8192 folded rows * (256-lane
# padded x + 128-lane padded out) * 4 B * 2 buffers ~= 24 MiB.
DEFAULT_BLOCK_ROWS = 8192
SMALL_BATCH_ROWS = 1024       # raw rows below which a single block is used
MIN_GRID_STEPS = 4            # keep the pipeline busy for mid-size batches
VMEM_LIMIT_BYTES = 48 << 20   # explicit; fits v5e/v6e and v7x's 64 MiB/TC


def _round_up(n, m):
    return ((n + m - 1) // m) * m


def _pick_fold_factor():
    """Fold factor for GEMM widening: 3 on v5e (128-deep MXU), else 7 (256-deep)."""
    try:
        kind = jax.devices()[0].device_kind.lower()
        if "v5 lite" in kind or "v5lite" in kind or "v5e" in kind:
            return 3
    except Exception:
        pass
    return 7


def linear_kernel(x_ref, wt_ref, b_ref, o_ref):
    # x_ref: (TB, F*f), wt_ref: (F*f, O*f) block-diagonal, b_ref: (1, O*f),
    # o_ref: (TB, O*f).  Plain MXU dot with f32 accumulation; no activation.
    acc = jnp.dot(x_ref[...], wt_ref[...], preferred_element_type=jnp.float32)
    o_ref[...] = (acc + b_ref[...]).astype(o_ref.dtype)


def logistic_regression_forward(x, w, b, *, block_rows=DEFAULT_BLOCK_ROWS, fold=None):
    """x: (B, F) float; w: (O, F) as in nn.Linear; b: (O,). Returns (B, O)."""
    B, F = x.shape
    O = w.shape[0]
    dtype = x.dtype
    if fold is None:
        fold = _pick_fold_factor()
    fold = max(1, fold)

    # ---- one-time layout plumbing in the wrapper (tiny, VMEM-resident) ----
    wt = jnp.asarray(w, dtype).T                      # (F, O)
    Kf, Nf = F * fold, O * fold
    wt_bd = jnp.zeros((Kf, Nf), dtype)                # block-diagonal W^T
    for i in range(fold):
        wt_bd = wt_bd.at[i * F:(i + 1) * F, i * O:(i + 1) * O].set(wt)
    b_bd = jnp.tile(jnp.asarray(b, dtype).reshape(1, O), (1, fold))  # (1, O*f)

    # ---- fold batch rows into the contraction dim (free row-major reshape) ----
    B_pad = _round_up(B, fold)
    xp = jnp.pad(x, ((0, B_pad - B), (0, 0))) if B_pad != B else x
    Bf = B_pad // fold
    xf = xp.reshape(Bf, Kf)                           # (B/f, F*f)

    # ---- batch tile selection ----
    if B <= SMALL_BATCH_ROWS:
        tb = Bf                                       # single full-extent block
    else:
        tb = min(block_rows, _round_up(pl.cdiv(Bf, MIN_GRID_STEPS), 8))
        tb = max(tb, 8)                               # keep (8,128) rule satisfied
    grid = (pl.cdiv(Bf, tb),)

    itemsize = jnp.dtype(dtype).itemsize
    cost = pl.CostEstimate(
        flops=2 * B * F * O,
        transcendentals=0,
        bytes_accessed=(B * F + B * O + F * O + O) * itemsize,
    )

    out_f = pl.pallas_call(
        linear_kernel,
        out_shape=jax.ShapeDtypeStruct((Bf, Nf), dtype),
        grid_spec=pltpu.PrefetchScalarGridSpec(
            num_scalar_prefetch=0,
            grid=grid,
            in_specs=[
                pl.BlockSpec((tb, Kf), lambda i: (i, 0)),   # x: tiled over batch
                pl.BlockSpec((Kf, Nf), lambda i: (0, 0)),   # block-diag W^T: resident
                pl.BlockSpec((1, Nf), lambda i: (0, 0)),    # bias: resident
            ],
            out_specs=pl.BlockSpec((tb, Nf), lambda i: (i, 0)),
        ),
        compiler_params=pltpu.CompilerParams(
            dimension_semantics=("parallel",),   # megacore sharding on v7x
            vmem_limit_bytes=VMEM_LIMIT_BYTES,
        ),
        cost_estimate=cost,
    )(xf, wt_bd, b_bd)

    out = out_f.reshape(B_pad, O)                     # free row-major reshape
    return out[:B] if B_pad != B else out


if __name__ == "__main__":
    key = jax.random.PRNGKey(0)
    kx, kw, kb, kx2 = jax.random.split(key, 4)

    # Deterministic parameter init (matches nn.Linear's U(-1/sqrt(in), 1/sqrt(in)))
    bound = 1.0 / (INPUT_DIM ** 0.5)
    w = jax.random.uniform(kw, (OUTPUT_DIM, INPUT_DIM), jnp.float32, -bound, bound)
    b = jax.random.uniform(kb, (OUTPUT_DIM,), jnp.float32, -bound, bound)

    # Small-batch check: exercises the fold-padding (8 % 7 != 0) + single-block path.
    batch = 8
    x = jax.random.normal(kx, (batch, INPUT_DIM), jnp.float32)
    out = jax.block_until_ready(logistic_regression_forward(x, w, b))
    ref = x @ w.T + b
    assert out.shape == (batch, OUTPUT_DIM)
    assert jnp.allclose(out, ref, atol=1e-5, rtol=1e-5)

    # Larger-batch check exercising the multi-step tiled / pipelined path
    # (small block_rows forces several grid steps plus a partial last block).
    batch2 = 4096
    x2 = jax.random.normal(kx2, (batch2, INPUT_DIM), jnp.float32)
    out2 = jax.block_until_ready(
        logistic_regression_forward(x2, w, b, block_rows=64)
    )
    ref2 = x2 @ w.T + b
    assert out2.shape == (batch2, OUTPUT_DIM)
    assert jnp.allclose(out2, ref2, atol=1e-5, rtol=1e-5)

    print("KERNEL_OK")
</pallas_src>

<mosaic_0001>
module attributes {stable_mosaic.version = 11 : i64} {
  func.func @linear_kernel(%arg0: i32, %arg1: memref<2x245xf32, #tpu.memory_space<vmem>>, %arg2: memref<245x14xf32, #tpu.memory_space<vmem>>, %arg3: memref<1x14xf32, #tpu.memory_space<vmem>>, %arg4: memref<2x14xf32, #tpu.memory_space<vmem>>) attributes {dimension_semantics = [#tpu.dimension_semantics<parallel>], iteration_bounds = array<i64: 1>, scalar_prefetch = 0 : i64, scratch_operands = 0 : i64, tpu.core_type = #tpu.core_type<tc>, window_params = [{transform_indices = @transform_0, window_bounds = array<i64: 2, 245>}, {pipeline_mode = #tpu.pipeline_mode<synchronous>, transform_indices = @transform_1, window_bounds = array<i64: 245, 14>}, {pipeline_mode = #tpu.pipeline_mode<synchronous>, transform_indices = @transform_2, window_bounds = array<i64: 1, 14>}, {transform_indices = @transform_3, window_bounds = array<i64: 2, 14>}]} {
    %c0 = arith.constant 0 : index
    %c0_0 = arith.constant 0 : index
    %0 = vector.load %arg1[%c0, %c0_0] : memref<2x245xf32, #tpu.memory_space<vmem>>, vector<2x245xf32>
    %c0_1 = arith.constant 0 : index
    %c0_2 = arith.constant 0 : index
    %1 = vector.load %arg2[%c0_1, %c0_2] : memref<245x14xf32, #tpu.memory_space<vmem>>, vector<245x14xf32>
    %cst = arith.constant dense<0.000000e+00> : vector<2x14xf32>
    %2 = tpu.matmul %0, %1, %cst {dimension_numbers = #tpu.dot_dimension_numbers<[1], [0], [0], [1], [0, 0, 1, 1], [], []>} : vector<2x245xf32>, vector<245x14xf32>, vector<2x14xf32> -> vector<2x14xf32>
    %c0_3 = arith.constant 0 : index
    %c0_4 = arith.constant 0 : index
    %3 = vector.load %arg3[%c0_3, %c0_4] : memref<1x14xf32, #tpu.memory_space<vmem>>, vector<1x14xf32>
    %4 = vector.broadcast %3 : vector<1x14xf32> to vector<2x14xf32>
    %5 = arith.addf %2, %4 : vector<2x14xf32>
    %c0_5 = arith.constant 0 : index
    %c0_6 = arith.constant 0 : index
    %6 = vector.load %arg4[%c0_5, %c0_6] : memref<2x14xf32, #tpu.memory_space<vmem>>, vector<2x14xf32>
    tpu.vector_store %arg4[%c0_5, %c0_6], %5 {strides = array<i32>} : memref<2x14xf32, #tpu.memory_space<vmem>>, vector<2x14xf32>,
    return
  }
  func.func @transform_0(%arg0: i32) -> (i32, i32) {
    %c0_i32 = arith.constant 0 : i32
    %c0_i32_0 = arith.constant 0 : i32
    return %arg0, %c0_i32 : i32, i32
  }
  func.func @transform_1(%arg0: i32) -> (i32, i32) {
    %c0_i32 = arith.constant 0 : i32
    %c0_i32_0 = arith.constant 0 : i32
    %c0_i32_1 = arith.constant 0 : i32
    return %c0_i32, %c0_i32_0 : i32, i32
  }
  func.func @transform_2(%arg0: i32) -> (i32, i32) {
    %c0_i32 = arith.constant 0 : i32
    %c0_i32_0 = arith.constant 0 : i32
    %c0_i32_1 = arith.constant 0 : i32
    return %c0_i32, %c0_i32_0 : i32, i32
  }
  func.func @transform_3(%arg0: i32) -> (i32, i32) {
    %c0_i32 = arith.constant 0 : i32
    %c0_i32_0 = arith.constant 0 : i32
    return %arg0, %c0_i32 : i32, i32
  }
}

</mosaic_0001>

<llo_original>
// kernel: tpu_custom_call.1
$region0: #{tpu_custom_call.1}
  #allocation0 [shape = 'u32[]', space=smem, size = 0x4, offset = 0x4, fixed_abs, tag = 'smem constant byte address 0x4 - core index']
  #allocation1 [shape = 'u32[72,128]{1,0:T(1,128)}', space=vmem, size = 0x9000, scoped, tag = 'internal scratch']
  %s0 = inlined_call_operand.vmem [shape: f32[2,245], index: 0, kind: input, shape index: {}]
  %s1 = inlined_call_operand.vmem [shape: f32[245,14], index: 1, kind: input, shape index: {}]
  %s2 = inlined_call_operand.vmem [shape: f32[1,14], index: 2, kind: input, shape index: {}]
  %s3 = inlined_call_operand.hbm [shape: f32[2,14], index: 3, kind: output, shape index: {}]
  %s4 = sld [smem:[#allocation0]]
  $region22: #{tpu_custom_call.1} parent=0
    _
  %s6 = ssub.s32 1, %s4
  %s7 = scalar_select 0, %s6, %s4
  $region1: #{tpu_custom_call.1} parent=0
    #allocation2 [shape = 'u8[1024]{0}', space=vmem, size = 0x400, scoped, tag = 'output window, operand 0, single buffered']
    #allocation3 [shape = 's32[1]{0}', space=sflag, size = 0x4, scoped, tag = 'scoped memory for tpu_custom_call.1']
    %8 = vsyncpa [#allocation3], 0
    // Predicated region
    $region2: #{tpu_custom_call.1} parent=1 // pred_check
      _
    $region3: #{tpu_custom_call.1} parent=1 // pred_check_branch
      %10 = sbr.rel (0) target = $region5
    $region4: #{tpu_custom_call.1} parent=1 // pred_region
      _
    $region5: #{tpu_custom_call.1} parent=1 // pred_fallthru
      _
    // Predicated region
    $region6: #{tpu_custom_call.1} parent=1 // pred_check
      _
    $region7: #{tpu_custom_call.1} parent=1 // pred_check_branch
      %12 = sbr.rel (0) target = $region9
    $region8: #{tpu_custom_call.1} parent=1 // pred_region
      _
    $region9: #{tpu_custom_call.1} parent=1 // pred_fallthru
      _
    // Predicated region
    $region10: #{tpu_custom_call.1} parent=1 // pred_check
      _
    $region11: #{tpu_custom_call.1} parent=1 // pred_check_branch
      %14 = sbr.rel (0) target = $region13
    $region12: #{tpu_custom_call.1} parent=1 // pred_region
      _
    $region13: #{tpu_custom_call.1} parent=1 // pred_fallthru
      _
    %v15 = vld [vmem:[%s0] sm:$0xf]
    %v16 = vld [vmem:[%s1] sm:$0xff]
    %v17 = vld [vmem:[%s1 + $0x8] sm:$0xff]
    %v18 = vld [vmem:[%s1 + $0x10] sm:$0xff]
    %v19 = vld [vmem:[%s1 + $0x18] sm:$0xff]
    %v20 = vld [vmem:[%s1 + $0x20] sm:$0xff]
    %v21 = vld [vmem:[%s1 + $0x28] sm:$0xff]
    %v22 = vld [vmem:[%s1 + $0x30] sm:$0xff]
    %v23 = vld [vmem:[%s1 + $0x38] sm:$0xff]
    %v24 = vld [vmem:[%s1 + $0x40] sm:$0xff]
    %v25 = vld [vmem:[%s1 + $0x48] sm:$0xff]
    %v26 = vld [vmem:[%s1 + $0x50] sm:$0xff]
    %v27 = vld [vmem:[%s1 + $0x58] sm:$0xff]
    %v28 = vld [vmem:[%s1 + $0x60] sm:$0xff]
    %v29 = vld [vmem:[%s1 + $0x68] sm:$0xff]
    %v30 = vld [vmem:[%s1 + $0x70] sm:$0xff]
    %v31 = vld [vmem:[%s1 + $0x78] sm:$0xff]
    %v32 = vld [vmem:[%s1 + $0x80] sm:$0xff]
    %v33 = vld [vmem:[%s1 + $0x88] sm:$0xff]
    %v34 = vld [vmem:[%s1 + $0x90] sm:$0xff]
    %v35 = vld [vmem:[%s1 + $0x98] sm:$0xff]
    %v36 = vld [vmem:[%s1 + $0xa0] sm:$0xff]
    %v37 = vld [vmem:[%s1 + $0xa8] sm:$0xff]
    %v38 = vld [vmem:[%s1 + $0xb0] sm:$0xff]
    %v39 = vld [vmem:[%s1 + $0xb8] sm:$0xff]
    %v40 = vld [vmem:[%s1 + $0xc0] sm:$0xff]
    %v41 = vld [vmem:[%s1 + $0xc8] sm:$0xff]
    %v42 = vld [vmem:[%s1 + $0xd0] sm:$0xff]
    %v43 = vld [vmem:[%s1 + $0xd8] sm:$0xff]
    %v44 = vld [vmem:[%s1 + $0xe0] sm:$0xff]
    %v45 = vld [vmem:[%s1 + $0xe8] sm:$0xff]
    %v46 = vld [vmem:[%s1 + $0xf0] sm:$0x1f]
    %v47 = vld [vmem:[%s2] sm:$0x1]
    %v49 = vperm.slane %v47, 0
    %52 = vst [vmem:[#allocation1] ss:$4 sm:$0xff] %v15
    %v53 = vld.sshfl [vmem:[#allocation1] sm:$0xff pattern:$0x73625140]
    %v54 = vld.sshfl [vmem:[#allocation1 + $0x8] sm:$0xff pattern:$0x73625140]
    %vm56 = vcmask 957440
    %v57 = vsel %vm56, %v54, 0
    %vm59 = vcmask 1044480
    %v61 = vsel %vm59, %v46, 0
    %63 = vmatpush.msra.mxu0 %v31
    %64 = vmatpush.msra.mxu0 %v30
    %65 = vmatpush.msra.mxu0 %v29
    %66 = vmatpush.msra.mxu0 %v28
    %67 = vmatpush.msra.mxu0 %v27
    %68 = vmatpush.msra.mxu0 %v26
    %69 = vmatpush.msra.mxu0 %v25
    %70 = vmatpush.msra.mxu0 %v24
    %71 = vmatpush.msra.mxu0 %v23
    %72 = vmatpush.msra.mxu0 %v22
    %73 = vmatpush.msra.mxu0 %v21
    %74 = vmatpush.msra.mxu0 %v20
    %75 = vmatpush.msra.mxu0 %v19
    %76 = vmatpush.msra.mxu0 %v18
    %77 = vmatpush.msra.mxu0 %v17
    %78 = vmatpush.msra.mxu0 %v16
    %79 = vmatmul.f32.gmra.mxu0 %v53
    %v80 = vpop.f32.mrf.mxu0
    %v81 = vadd.f32 %v49, %v80
    %82 = vdwg.mxu0
    %83 = vmatpush.msra.mxu0 0.0
    %84 = vmatpush.msra.mxu0 %v61
    %85 = vmatpush.msra.mxu0 %v45
    %86 = vmatpush.msra.mxu0 %v44
    %87 = vmatpush.msra.mxu0 %v43
    %88 = vmatpush.msra.mxu0 %v42
    %89 = vmatpush.msra.mxu0 %v41
    %90 = vmatpush.msra.mxu0 %v40
    %91 = vmatpush.msra.mxu0 %v39
    %92 = vmatpush.msra.mxu0 %v38
    %93 = vmatpush.msra.mxu0 %v37
    %94 = vmatpush.msra.mxu0 %v36
    %95 = vmatpush.msra.mxu0 %v35
    %96 = vmatpush.msra.mxu0 %v34
    %97 = vmatpush.msra.mxu0 %v33
    %98 = vmatpush.msra.mxu0 %v32
    %99 = vmatmul.f32.gmra.mxu0 %v57
    %v100 = vpop.f32.mrf.mxu0
    %v101 = vadd.f32 %v81, %v100
    %102 = vdwg.mxu0
    %vm103 = vcmask 107520
    %104 = vst.msk [vmem:[#allocation2] sm:$0x3] %vm103, %v101
    // Predicated region
    $region14: #{tpu_custom_call.1} parent=1 // pred_check
      _
    $region15: #{tpu_custom_call.1} parent=1 // pred_check_branch
      %106 = sbr.rel (0) target = $region17
    $region16: #{tpu_custom_call.1} parent=1 // pred_region
      %108 = vsyncadd [#allocation3], 0
      %s110 = sshll.u32 [#allocation2], 4
      %s111 = int_to_ptr.vmem [resolvable:$true] %s110
      %s112 = sshll.u32 %s3, 4
      %s113 = int_to_ptr.hbm [resolvable:$true] %s112
      %115 = dma.vmem_to_hbm [thread:$0]  %s111, 32, %s113, [#allocation3]
    $region17: #{tpu_custom_call.1} parent=1 // pred_fallthru
      _
    // Predicated region
    $region18: #{tpu_custom_call.1} parent=1 // pred_check
      _
    $region19: #{tpu_custom_call.1} parent=1 // pred_check_branch
      %117 = sbr.rel (0) target = $region21
    $region20: #{tpu_custom_call.1} parent=1 // pred_region
      %119 = dma.done [#allocation3], 32
    $region21: #{tpu_custom_call.1} parent=1 // pred_fallthru
      _
    %120 = vsyncpa [#allocation3], 1

</llo_original>
